<compile_context>
chip_gen: v7x
topology: tpu7x:2x2x1
jax: 0.10.0
libtpu: 0.0.40
codegen_flags: <defaults>
</compile_context>

<pallas_src>
import jax
import jax.numpy as jnp
from jax.experimental import pallas as pl
from jax.experimental.pallas import tpu as pltpu

N_STATE = 4
HIDDEN = 64
LANE = 128
LANE_CHUNK = 512   # bound on the (H, chunk) f32 hidden live range (32 vregs)


def critic_kernel(p_ref, b2_ref, s_ref, a_ref, o_ref):
    # p_ref : (H, PACK) VMEM  packed params: cols 0..n_state-1 = W1_state^T,
    #                          n_state = W1_action, n_state+1 = b1, n_state+2 = w2
    # b2_ref: (1, 1)    SMEM  fc2 bias scalar
    # s_ref : (n_state, tb) VMEM  states,  batch along lanes
    # a_ref : (1, tb)       VMEM  actions, batch along lanes
    # o_ref : (1, tb)       VMEM  Q-values, batch along lanes (lane-dense store)
    n_state = s_ref.shape[0]
    p = p_ref[...]
    w1s = [p[:, k:k + 1] for k in range(n_state)]      # (H, 1) columns
    w1a = p[:, n_state:n_state + 1]                     # (H, 1)
    b1 = p[:, n_state + 1:n_state + 2]                  # (H, 1)
    w2 = p[:, n_state + 2:n_state + 3]                  # (H, 1)
    b2 = b2_ref[0, 0]

    tb = o_ref.shape[1]
    chunk = min(tb, LANE_CHUNK)
    # Static (unrolled) loop over lane sub-chunks keeps the (H, chunk) hidden
    # activation inside the 64-vreg file even for very large lane tiles.
    for c in range(0, tb, chunk):
        cw = min(chunk, tb - c)
        s = s_ref[:, c:c + cw]                          # (n_state, cw)
        a = a_ref[:, c:c + cw]                          # (1, cw)

        # Fused concat + fc1 as VPU outer-product multiply-adds:
        #   h[j, b] = b1[j] + W1a[j]*a[b] + sum_k W1s[k, j]*s[k, b]
        h = b1 + w1a * a
        for k in range(n_state):
            h = h + w1s[k] * s[k:k + 1, :]
        h = jnp.maximum(h, 0.0)                         # ReLU, (H, cw)

        # fc2: weight-scaled sublane reduce (XLU) -> lane-dense (1, cw) row.
        q = jnp.sum(h * w2, axis=0, keepdims=True) + b2
        o_ref[:, c:c + cw] = q.astype(o_ref.dtype)


def _pack_params(w1, b1, w2, n_state):
    """Pack fc1/fc2 params into one (H, PACK) f32 operand (see kernel docstring)."""
    H = w1.shape[1]
    pack = max(8, n_state + 3)
    p = jnp.zeros((H, pack), jnp.float32)
    p = p.at[:, :n_state].set(w1[:n_state, :].astype(jnp.float32).T)   # W1_state^T
    p = p.at[:, n_state].set(w1[n_state, :].astype(jnp.float32))       # W1_action
    p = p.at[:, n_state + 1].set(b1.reshape(H).astype(jnp.float32))    # b1
    p = p.at[:, n_state + 2].set(w2.reshape(H).astype(jnp.float32))    # w2
    return p


def _critic_call(params, b2, s_T, a_T, *, tb, nb):
    n_state, b_here = s_T.shape
    H, pack = params.shape
    return pl.pallas_call(
        critic_kernel,
        out_shape=jax.ShapeDtypeStruct((1, b_here), jnp.float32),
        grid=(nb,),
        in_specs=[
            pl.BlockSpec((H, pack), lambda i: (0, 0)),            # packed params
            pl.BlockSpec(memory_space=pltpu.MemorySpace.SMEM),    # b2 scalar
            pl.BlockSpec((n_state, tb), lambda i: (0, i)),        # states (lane-dense)
            pl.BlockSpec((1, tb), lambda i: (0, i)),              # actions (lane-dense)
        ],
        out_specs=pl.BlockSpec((1, tb), lambda i: (0, i)),        # Q row (lane-dense)
        compiler_params=pltpu.CompilerParams(
            dimension_semantics=("parallel",)),
    )(params, b2, s_T, a_T)


def critic_forward(s, a, w1, b1, w2, b2, *, block_b=512):
    """s: (B, n_state), a: (B, 1); w1: (n_state+1, H) [in, out]; b1: (1, H) or (H,);
       w2: (H, 1); b2: (1, 1) or (1,).  Returns (B, 1) float32 Q-values."""
    B, n_state = s.shape
    assert w1.shape[0] == n_state + 1

    params = _pack_params(w1, b1, w2, n_state)            # (H, PACK) VMEM operand
    b2s = jnp.asarray(b2, jnp.float32).reshape(1, 1)

    # Batch-on-lanes layout.  a is (B, 1) so its transpose is a free reshape.
    # TODO(synk): callers that control activation storage should keep s
    # transposed (n_state, B) upstream to avoid this (tiny) XLA transpose.
    s_T = s.astype(jnp.float32).T                         # (n_state, B)
    a_T = a.astype(jnp.float32).reshape(1, B)             # (1, B)

    # Lane-tile selection: multiples of 128 (BlockSpec lane rule), and keep
    # >= 2 grid steps when the batch allows it so the "parallel" axis can be
    # sharded across both v7x TensorCores.  No padding: the ragged tail is a
    # second single-block call (block = full extent, so no 128 alignment).
    if B < 2 * LANE:
        tb = B
    else:
        tb = max(LANE, (min(block_b, B // 2) // LANE) * LANE)
    nb = max(1, B // tb)
    b_main = nb * tb
    rem = B - b_main

    pieces = [_critic_call(params, b2s, s_T[:, :b_main], a_T[:, :b_main],
                           tb=tb, nb=nb).reshape(b_main)]
    if rem:
        pieces.append(_critic_call(params, b2s, s_T[:, b_main:], a_T[:, b_main:],
                                   tb=rem, nb=1).reshape(rem))
    q = pieces[0] if not rem else jnp.concatenate(pieces)
    return q.reshape(B, 1)


def init_params(key, n_state=N_STATE):
    """Deterministic init mirroring the PyTorch module:
       weights ~ Normal(0, 0.01); biases use torch.nn.Linear default
       Uniform(-1/sqrt(fan_in), 1/sqrt(fan_in))."""
    k1, k2, k3, k4 = jax.random.split(key, 4)
    fan1 = n_state + 1
    fan2 = HIDDEN
    w1 = 0.01 * jax.random.normal(k1, (fan1, HIDDEN), dtype=jnp.float32)
    b1 = jax.random.uniform(k2, (1, HIDDEN), dtype=jnp.float32,
                            minval=-1.0 / jnp.sqrt(fan1), maxval=1.0 / jnp.sqrt(fan1))
    w2 = 0.01 * jax.random.normal(k3, (fan2, 1), dtype=jnp.float32)
    b2 = jax.random.uniform(k4, (1, 1), dtype=jnp.float32,
                            minval=-1.0 / jnp.sqrt(fan2), maxval=1.0 / jnp.sqrt(fan2))
    return w1, b1, w2, b2


if __name__ == "__main__":
    key = jax.random.PRNGKey(0)
    k_s, k_a, k_p = jax.random.split(key, 3)

    B = 8
    s = jax.random.normal(k_s, (B, N_STATE), dtype=jnp.float32)   # state
    a = jax.random.normal(k_a, (B, 1), dtype=jnp.float32)         # action
    w1, b1, w2, b2 = init_params(k_p)

    q = critic_forward(s, a, w1, b1, w2, b2)
    jax.block_until_ready(q)

    # Pure-JAX reference check (same math, no Pallas).
    x = jnp.concatenate([s, a], axis=1)
    ref = jnp.maximum(x @ w1 + b1, 0.0) @ w2 + b2
    assert q.shape == (B, 1)
    assert jnp.allclose(q, ref, atol=1e-5, rtol=1e-5)

    # Second check exercising the tiled path + ragged tail (multi-block grid).
    B2 = 300
    s2 = jax.random.normal(k_s, (B2, N_STATE), dtype=jnp.float32)
    a2 = jax.random.normal(k_a, (B2, 1), dtype=jnp.float32)
    q2 = critic_forward(s2, a2, w1, b1, w2, b2)
    jax.block_until_ready(q2)
    x2 = jnp.concatenate([s2, a2], axis=1)
    ref2 = jnp.maximum(x2 @ w1 + b1, 0.0) @ w2 + b2
    assert q2.shape == (B2, 1)
    assert jnp.allclose(q2, ref2, atol=1e-5, rtol=1e-5)

    print("KERNEL_OK")
</pallas_src>

<mosaic_0001>
module attributes {stable_mosaic.version = 11 : i64} {
  func.func @critic_kernel(%arg0: i32, %arg1: memref<64x8xf32, #tpu.memory_space<vmem>>, %arg2: memref<1x1xf32, #tpu.memory_space<smem>>, %arg3: memref<4x8xf32, #tpu.memory_space<vmem>>, %arg4: memref<1x8xf32, #tpu.memory_space<vmem>>, %arg5: memref<1x8xf32, #tpu.memory_space<vmem>>) attributes {dimension_semantics = [#tpu.dimension_semantics<parallel>], iteration_bounds = array<i64: 1>, scalar_prefetch = 0 : i64, scratch_operands = 0 : i64, tpu.core_type = #tpu.core_type<tc>, window_params = [{pipeline_mode = #tpu.pipeline_mode<synchronous>, transform_indices = @transform_0, window_bounds = array<i64: 64, 8>}, {transform_indices = @transform_1, window_bounds = array<i64: 1, 1>}, {transform_indices = @transform_2, window_bounds = array<i64: 4, 8>}, {transform_indices = @transform_3, window_bounds = array<i64: 1, 8>}, {transform_indices = @transform_4, window_bounds = array<i64: 1, 8>}]} {
    %c0 = arith.constant 0 : index
    %c0_0 = arith.constant 0 : index
    %0 = vector.load %arg1[%c0, %c0_0] : memref<64x8xf32, #tpu.memory_space<vmem>>, vector<64x8xf32>
    %1 = vector.extract_strided_slice %0 {offsets = [0, 0], sizes = [64, 1], strides = [1, 1]} : vector<64x8xf32> to vector<64x1xf32>
    %2 = vector.extract_strided_slice %0 {offsets = [0, 1], sizes = [64, 1], strides = [1, 1]} : vector<64x8xf32> to vector<64x1xf32>
    %3 = vector.extract_strided_slice %0 {offsets = [0, 2], sizes = [64, 1], strides = [1, 1]} : vector<64x8xf32> to vector<64x1xf32>
    %4 = vector.extract_strided_slice %0 {offsets = [0, 3], sizes = [64, 1], strides = [1, 1]} : vector<64x8xf32> to vector<64x1xf32>
    %5 = vector.extract_strided_slice %0 {offsets = [0, 4], sizes = [64, 1], strides = [1, 1]} : vector<64x8xf32> to vector<64x1xf32>
    %6 = vector.extract_strided_slice %0 {offsets = [0, 5], sizes = [64, 1], strides = [1, 1]} : vector<64x8xf32> to vector<64x1xf32>
    %7 = vector.extract_strided_slice %0 {offsets = [0, 6], sizes = [64, 1], strides = [1, 1]} : vector<64x8xf32> to vector<64x1xf32>
    %c0_1 = arith.constant 0 : index
    %c0_2 = arith.constant 0 : index
    %8 = memref.load %arg2[%c0_1, %c0_2] : memref<1x1xf32, #tpu.memory_space<smem>>
    %c0_3 = arith.constant 0 : index
    %c0_4 = arith.constant 0 : index
    %9 = vector.load %arg3[%c0_3, %c0_4] : memref<4x8xf32, #tpu.memory_space<vmem>>, vector<4x8xf32>
    %c0_5 = arith.constant 0 : index
    %c0_6 = arith.constant 0 : index
    %10 = vector.load %arg4[%c0_5, %c0_6] : memref<1x8xf32, #tpu.memory_space<vmem>>, vector<1x8xf32>
    %11 = vector.broadcast %5 : vector<64x1xf32> to vector<64x8xf32>
    %12 = vector.broadcast %10 : vector<1x8xf32> to vector<64x8xf32>
    %13 = arith.mulf %11, %12 : vector<64x8xf32>
    %14 = vector.broadcast %6 : vector<64x1xf32> to vector<64x8xf32>
    %15 = arith.addf %14, %13 : vector<64x8xf32>
    %16 = vector.extract_strided_slice %9 {offsets = [0, 0], sizes = [1, 8], strides = [1, 1]} : vector<4x8xf32> to vector<1x8xf32>
    %17 = vector.broadcast %1 : vector<64x1xf32> to vector<64x8xf32>
    %18 = vector.broadcast %16 : vector<1x8xf32> to vector<64x8xf32>
    %19 = arith.mulf %17, %18 : vector<64x8xf32>
    %20 = arith.addf %15, %19 : vector<64x8xf32>
    %21 = vector.extract_strided_slice %9 {offsets = [1, 0], sizes = [1, 8], strides = [1, 1]} : vector<4x8xf32> to vector<1x8xf32>
    %22 = vector.broadcast %2 : vector<64x1xf32> to vector<64x8xf32>
    %23 = vector.broadcast %21 : vector<1x8xf32> to vector<64x8xf32>
    %24 = arith.mulf %22, %23 : vector<64x8xf32>
    %25 = arith.addf %20, %24 : vector<64x8xf32>
    %26 = vector.extract_strided_slice %9 {offsets = [2, 0], sizes = [1, 8], strides = [1, 1]} : vector<4x8xf32> to vector<1x8xf32>
    %27 = vector.broadcast %3 : vector<64x1xf32> to vector<64x8xf32>
    %28 = vector.broadcast %26 : vector<1x8xf32> to vector<64x8xf32>
    %29 = arith.mulf %27, %28 : vector<64x8xf32>
    %30 = arith.addf %25, %29 : vector<64x8xf32>
    %31 = vector.extract_strided_slice %9 {offsets = [3, 0], sizes = [1, 8], strides = [1, 1]} : vector<4x8xf32> to vector<1x8xf32>
    %32 = vector.broadcast %4 : vector<64x1xf32> to vector<64x8xf32>
    %33 = vector.broadcast %31 : vector<1x8xf32> to vector<64x8xf32>
    %34 = arith.mulf %32, %33 : vector<64x8xf32>
    %35 = arith.addf %30, %34 : vector<64x8xf32>
    %cst = arith.constant 0.000000e+00 : f32
    %36 = vector.broadcast %cst : f32 to vector<64x8xf32>
    %37 = arith.maximumf %35, %36 : vector<64x8xf32>
    %38 = vector.broadcast %7 : vector<64x1xf32> to vector<64x8xf32>
    %39 = arith.mulf %37, %38 : vector<64x8xf32>
    %cst_7 = arith.constant dense<0.000000e+00> : vector<8xf32>
    %40 = vector.multi_reduction <add>, %39, %cst_7 [0] : vector<64x8xf32> to vector<8xf32>
    %41 = vector.shape_cast %40 : vector<8xf32> to vector<1x8xf32>
    %42 = vector.broadcast %8 : f32 to vector<1x8xf32>
    %43 = arith.addf %41, %42 : vector<1x8xf32>
    %c0_8 = arith.constant 0 : index
    %c0_9 = arith.constant 0 : index
    %44 = vector.load %arg5[%c0_8, %c0_9] : memref<1x8xf32, #tpu.memory_space<vmem>>, vector<1x8xf32>
    tpu.vector_store %arg5[%c0_8, %c0_9], %43 {strides = array<i32>} : memref<1x8xf32, #tpu.memory_space<vmem>>, vector<1x8xf32>,
    return
  }
  func.func @transform_0(%arg0: i32) -> (i32, i32) {
    %c0_i32 = arith.constant 0 : i32
    %c0_i32_0 = arith.constant 0 : i32
    %c0_i32_1 = arith.constant 0 : i32
    return %c0_i32, %c0_i32_0 : i32, i32
  }
  func.func @transform_1(%arg0: i32) -> (i32, i32) {
    %c0_i32 = arith.constant 0 : i32
    %c0_i32_0 = arith.constant 0 : i32
    %c0_i32_1 = arith.constant 0 : i32
    return %c0_i32, %c0_i32_0 : i32, i32
  }
  func.func @transform_2(%arg0: i32) -> (i32, i32) {
    %c0_i32 = arith.constant 0 : i32
    %c0_i32_0 = arith.constant 0 : i32
    return %c0_i32, %arg0 : i32, i32
  }
  func.func @transform_3(%arg0: i32) -> (i32, i32) {
    %c0_i32 = arith.constant 0 : i32
    %c0_i32_0 = arith.constant 0 : i32
    return %c0_i32, %arg0 : i32, i32
  }
  func.func @transform_4(%arg0: i32) -> (i32, i32) {
    %c0_i32 = arith.constant 0 : i32
    %c0_i32_0 = arith.constant 0 : i32
    return %c0_i32, %arg0 : i32, i32
  }
}

</mosaic_0001>

<llo_original>
// kernel: tpu_custom_call.1
$region0: #{tpu_custom_call.1}
  #allocation0 [shape = 'u32[]', space=smem, size = 0x4, offset = 0x4, fixed_abs, tag = 'smem constant byte address 0x4 - core index']
  #allocation1 [shape = 'u32[144,128]{1,0:T(1,128)}', space=vmem, size = 0x12000, scoped, tag = 'internal scratch']
  #allocation2 [shape = 'f32[1,1]{1,0:T(1,128)S(6)}', space=smem, size = 0x200, scoped, tag = 'scoped memory for tpu_custom_call.1']
  %s0 = inlined_call_operand.vmem [shape: f32[64,8], index: 0, kind: input, shape index: {}]
  %s1 = inlined_call_operand.<no memory space> [shape: f32[1,1], index: 1, kind: input, shape index: {}]
  %s2 = inlined_call_operand.vmem [shape: f32[4,8], index: 2, kind: input, shape index: {}]
  %s3 = inlined_call_operand.vmem [shape: f32[1,8], index: 3, kind: input, shape index: {}]
  %s4 = inlined_call_operand.hbm [shape: f32[1,8], index: 4, kind: output, shape index: {}]
  %s5 = sld [smem:[#allocation0]]
  $region26: #{tpu_custom_call.1} parent=0
    _
  %s7 = ssub.s32 1, %s5
  %s8 = scalar_select 0, %s7, %s5
  %9 = sst [smem:[#allocation2]] %s1
  $region1: #{tpu_custom_call.1} parent=0
    #allocation3 [shape = 'u8[512]{0}', space=vmem, size = 0x400, scoped, tag = 'output window, operand 0, single buffered']
    #allocation4 [shape = 's32[1]{0}', space=sflag, size = 0x4, scoped, tag = 'scoped memory for tpu_custom_call.1']
    %10 = vsyncpa [#allocation4], 0
    // Predicated region
    $region2: #{tpu_custom_call.1} parent=1 // pred_check
      _
    $region3: #{tpu_custom_call.1} parent=1 // pred_check_branch
      %12 = sbr.rel (0) target = $region5
    $region4: #{tpu_custom_call.1} parent=1 // pred_region
      _
    $region5: #{tpu_custom_call.1} parent=1 // pred_fallthru
      _
    // Predicated region
    $region6: #{tpu_custom_call.1} parent=1 // pred_check
      _
    $region7: #{tpu_custom_call.1} parent=1 // pred_check_branch
      %14 = sbr.rel (0) target = $region9
    $region8: #{tpu_custom_call.1} parent=1 // pred_region
      _
    $region9: #{tpu_custom_call.1} parent=1 // pred_fallthru
      _
    // Predicated region
    $region10: #{tpu_custom_call.1} parent=1 // pred_check
      _
    $region11: #{tpu_custom_call.1} parent=1 // pred_check_branch
      %16 = sbr.rel (0) target = $region13
    $region12: #{tpu_custom_call.1} parent=1 // pred_region
      _
    $region13: #{tpu_custom_call.1} parent=1 // pred_fallthru
      _
    // Predicated region
    $region14: #{tpu_custom_call.1} parent=1 // pred_check
      _
    $region15: #{tpu_custom_call.1} parent=1 // pred_check_branch
      %18 = sbr.rel (0) target = $region17
    $region16: #{tpu_custom_call.1} parent=1 // pred_region
      _
    $region17: #{tpu_custom_call.1} parent=1 // pred_fallthru
      _
    %v19 = vld [vmem:[%s0] sm:$0xff]
    %v20 = vld [vmem:[%s0 + $0x8] sm:$0xff]
    %v21 = vld [vmem:[%s0 + $0x10] sm:$0xff]
    %v22 = vld [vmem:[%s0 + $0x18] sm:$0xff]
    %v23 = vld [vmem:[%s0 + $0x20] sm:$0xff]
    %v24 = vld [vmem:[%s0 + $0x28] sm:$0xff]
    %v25 = vld [vmem:[%s0 + $0x30] sm:$0xff]
    %v26 = vld [vmem:[%s0 + $0x38] sm:$0xff]
    %s27 = sld [smem:[#allocation2]]
    %v28 = vld [vmem:[%s2] sm:$0xf]
    %v29 = vld [vmem:[%s3] sm:$0x1]
    %31 = vset.pattern.permute.xlu0 4
    %32 = vperm.xlu0 %31, %v19
    %v33 = vpop.permute.xlu0 %32
    %36 = vset.pattern.permute.xlu0 4
    %37 = vperm.xlu0 %36, %v20
    %v38 = vpop.permute.xlu0 %37
    %41 = vset.pattern.permute.xlu0 4
    %42 = vperm.xlu0 %41, %v21
    %v43 = vpop.permute.xlu0 %42
    %46 = vset.pattern.permute.xlu0 4
    %47 = vperm.xlu0 %46, %v22
    %v48 = vpop.permute.xlu0 %47
    %51 = vset.pattern.permute.xlu0 4
    %52 = vperm.xlu0 %51, %v23
    %v53 = vpop.permute.xlu0 %52
    %56 = vset.pattern.permute.xlu0 4
    %57 = vperm.xlu0 %56, %v24
    %v58 = vpop.permute.xlu0 %57
    %61 = vset.pattern.permute.xlu0 4
    %62 = vperm.xlu0 %61, %v25
    %v63 = vpop.permute.xlu0 %62
    %66 = vset.pattern.permute.xlu0 4
    %67 = vperm.xlu0 %66, %v26
    %v68 = vpop.permute.xlu0 %67
    %v71 = vlaneseq
    %v72 = vshrl.u32 %v71, 7
    %v73 = vsub.s32 0, %v72
    %v74 = vrot.slane %v29, %v73
    %v76 = vmul.f32 %v33, %v74
    %v77 = vmul.f32 %v38, %v74
    %v78 = vmul.f32 %v43, %v74
    %v79 = vmul.f32 %v48, %v74
    %v80 = vmul.f32 %v53, %v74
    %v81 = vmul.f32 %v58, %v74
    %v82 = vmul.f32 %v63, %v74
    %v83 = vmul.f32 %v68, %v74
    %84 = vset.pattern.permute.xlu0 5
    %85 = vperm.xlu0 %84, %v19
    %v86 = vpop.permute.xlu0 %85
    %88 = vset.pattern.permute.xlu0 5
    %89 = vperm.xlu0 %88, %v20
    %v90 = vpop.permute.xlu0 %89
    %92 = vset.pattern.permute.xlu0 5
    %93 = vperm.xlu0 %92, %v21
    %v94 = vpop.permute.xlu0 %93
    %96 = vset.pattern.permute.xlu0 5
    %97 = vperm.xlu0 %96, %v22
    %v98 = vpop.permute.xlu0 %97
    %100 = vset.pattern.permute.xlu0 5
    %101 = vperm.xlu0 %100, %v23
    %v102 = vpop.permute.xlu0 %101
    %104 = vset.pattern.permute.xlu0 5
    %105 = vperm.xlu0 %104, %v24
    %v106 = vpop.permute.xlu0 %105
    %108 = vset.pattern.permute.xlu0 5
    %109 = vperm.xlu0 %108, %v25
    %v110 = vpop.permute.xlu0 %109
    %112 = vset.pattern.permute.xlu0 5
    %113 = vperm.xlu0 %112, %v26
    %v114 = vpop.permute.xlu0 %113
    %v116 = vadd.f32 %v86, %v76
    %v117 = vadd.f32 %v90, %v77
    %v118 = vadd.f32 %v94, %v78
    %v119 = vadd.f32 %v98, %v79
    %v120 = vadd.f32 %v102, %v80
    %v121 = vadd.f32 %v106, %v81
    %v122 = vadd.f32 %v110, %v82
    %v123 = vadd.f32 %v114, %v83
    %124 = vset.pattern.permute.xlu0 0
    %125 = vperm.xlu0 %124, %v19
    %v126 = vpop.permute.xlu0 %125
    %128 = vset.pattern.permute.xlu0 0
    %129 = vperm.xlu0 %128, %v20
    %v130 = vpop.permute.xlu0 %129
    %132 = vset.pattern.permute.xlu0 0
    %133 = vperm.xlu0 %132, %v21
    %v134 = vpop.permute.xlu0 %133
    %136 = vset.pattern.permute.xlu0 0
    %137 = vperm.xlu0 %136, %v22
    %v138 = vpop.permute.xlu0 %137
    %140 = vset.pattern.permute.xlu0 0
    %141 = vperm.xlu0 %140, %v23
    %v142 = vpop.permute.xlu0 %141
    %144 = vset.pattern.permute.xlu0 0
    %145 = vperm.xlu0 %144, %v24
    %v146 = vpop.permute.xlu0 %145
    %148 = vset.pattern.permute.xlu0 0
    %149 = vperm.xlu0 %148, %v25
    %v150 = vpop.permute.xlu0 %149
    %152 = vset.pattern.permute.xlu0 0
    %153 = vperm.xlu0 %152, %v26
    %v154 = vpop.permute.xlu0 %153
    %v156 = vlaneseq
    %v157 = vshrl.u32 %v156, 7
    %v158 = vsub.s32 0, %v157
    %v159 = vrot.slane %v28, %v158
    %v160 = vmul.f32 %v126, %v159
    %v161 = vmul.f32 %v130, %v159
    %v162 = vmul.f32 %v134, %v159
    %v163 = vmul.f32 %v138, %v159
    %v164 = vmul.f32 %v142, %v159
    %v165 = vmul.f32 %v146, %v159
    %v166 = vmul.f32 %v150, %v159
    %v167 = vmul.f32 %v154, %v159
    %v168 = vadd.f32 %v116, %v160
    %v169 = vadd.f32 %v117, %v161
    %v170 = vadd.f32 %v118, %v162
    %v171 = vadd.f32 %v119, %v163
    %v172 = vadd.f32 %v120, %v164
    %v173 = vadd.f32 %v121, %v165
    %v174 = vadd.f32 %v122, %v166
    %v175 = vadd.f32 %v123, %v167
    %176 = vset.pattern.permute.xlu0 1
    %177 = vperm.xlu0 %176, %v19
    %v178 = vpop.permute.xlu0 %177
    %180 = vset.pattern.permute.xlu0 1
    %181 = vperm.xlu0 %180, %v20
    %v182 = vpop.permute.xlu0 %181
    %184 = vset.pattern.permute.xlu0 1
    %185 = vperm.xlu0 %184, %v21
    %v186 = vpop.permute.xlu0 %185
    %188 = vset.pattern.permute.xlu0 1
    %189 = vperm.xlu0 %188, %v22
    %v190 = vpop.permute.xlu0 %189
    %192 = vset.pattern.permute.xlu0 1
    %193 = vperm.xlu0 %192, %v23
    %v194 = vpop.permute.xlu0 %193
    %196 = vset.pattern.permute.xlu0 1
    %197 = vperm.xlu0 %196, %v24
    %v198 = vpop.permute.xlu0 %197
    %200 = vset.pattern.permute.xlu0 1
    %201 = vperm.xlu0 %200, %v25
    %v202 = vpop.permute.xlu0 %201
    %204 = vset.pattern.permute.xlu0 1
    %205 = vperm.xlu0 %204, %v26
    %v206 = vpop.permute.xlu0 %205
    %v208 = vlaneseq
    %v209 = vshrl.u32 %v208, 7
    %v210 = vsub.s32 1, %v209
    %v211 = vrot.slane %v28, %v210
    %v212 = vmul.f32 %v178, %v211
    %v213 = vmul.f32 %v182, %v211
    %v214 = vmul.f32 %v186, %v211
    %v215 = vmul.f32 %v190, %v211
    %v216 = vmul.f32 %v194, %v211
    %v217 = vmul.f32 %v198, %v211
    %v218 = vmul.f32 %v202, %v211
    %v219 = vmul.f32 %v206, %v211
    %v220 = vadd.f32 %v168, %v212
    %v221 = vadd.f32 %v169, %v213
    %v222 = vadd.f32 %v170, %v214
    %v223 = vadd.f32 %v171, %v215
    %v224 = vadd.f32 %v172, %v216
    %v225 = vadd.f32 %v173, %v217
    %v226 = vadd.f32 %v174, %v218
    %v227 = vadd.f32 %v175, %v219
    %228 = vset.pattern.permute.xlu0 2
    %229 = vperm.xlu0 %228, %v19
    %v230 = vpop.permute.xlu0 %229
    %232 = vset.pattern.permute.xlu0 2
    %233 = vperm.xlu0 %232, %v20
    %v234 = vpop.permute.xlu0 %233
    %236 = vset.pattern.permute.xlu0 2
    %237 = vperm.xlu0 %236, %v21
    %v238 = vpop.permute.xlu0 %237
    %240 = vset.pattern.permute.xlu0 2
    %241 = vperm.xlu0 %240, %v22
    %v242 = vpop.permute.xlu0 %241
    %244 = vset.pattern.permute.xlu0 2
    %245 = vperm.xlu0 %244, %v23
    %v246 = vpop.permute.xlu0 %245
    %248 = vset.pattern.permute.xlu0 2
    %249 = vperm.xlu0 %248, %v24
    %v250 = vpop.permute.xlu0 %249
    %252 = vset.pattern.permute.xlu0 2
    %253 = vperm.xlu0 %252, %v25
    %v254 = vpop.permute.xlu0 %253
    %256 = vset.pattern.permute.xlu0 2
    %257 = vperm.xlu0 %256, %v26
    %v258 = vpop.permute.xlu0 %257
    %v260 = vlaneseq
    %v261 = vshrl.u32 %v260, 7
    %v262 = vsub.s32 2, %v261
    %v263 = vrot.slane %v28, %v262
    %v264 = vmul.f32 %v230, %v263
    %v265 = vmul.f32 %v234, %v263
    %v266 = vmul.f32 %v238, %v263
    %v267 = vmul.f32 %v242, %v263
    %v268 = vmul.f32 %v246, %v263
    %v269 = vmul.f32 %v250, %v263
    %v270 = vmul.f32 %v254, %v263
    %v271 = vmul.f32 %v258, %v263
    %v272 = vadd.f32 %v220, %v264
    %v273 = vadd.f32 %v221, %v265
    %v274 = vadd.f32 %v222, %v266
    %v275 = vadd.f32 %v223, %v267
    %v276 = vadd.f32 %v224, %v268
    %v277 = vadd.f32 %v225, %v269
    %v278 = vadd.f32 %v226, %v270
    %v279 = vadd.f32 %v227, %v271
    %280 = vset.pattern.permute.xlu0 3
    %281 = vperm.xlu0 %280, %v19
    %v282 = vpop.permute.xlu0 %281
    %284 = vset.pattern.permute.xlu0 3
    %285 = vperm.xlu0 %284, %v20
    %v286 = vpop.permute.xlu0 %285
    %288 = vset.pattern.permute.xlu0 3
    %289 = vperm.xlu0 %288, %v21
    %v290 = vpop.permute.xlu0 %289
    %292 = vset.pattern.permute.xlu0 3
    %293 = vperm.xlu0 %292, %v22
    %v294 = vpop.permute.xlu0 %293
    %296 = vset.pattern.permute.xlu0 3
    %297 = vperm.xlu0 %296, %v23
    %v298 = vpop.permute.xlu0 %297
    %300 = vset.pattern.permute.xlu0 3
    %301 = vperm.xlu0 %300, %v24
    %v302 = vpop.permute.xlu0 %301
    %304 = vset.pattern.permute.xlu0 3
    %305 = vperm.xlu0 %304, %v25
    %v306 = vpop.permute.xlu0 %305
    %308 = vset.pattern.permute.xlu0 3
    %309 = vperm.xlu0 %308, %v26
    %v310 = vpop.permute.xlu0 %309
    %v312 = vlaneseq
    %v313 = vshrl.u32 %v312, 7
    %v314 = vsub.s32 3, %v313
    %v315 = vrot.slane %v28, %v314
    %v316 = vmul.f32 %v282, %v315
    %v317 = vmul.f32 %v286, %v315
    %v318 = vmul.f32 %v290, %v315
    %v319 = vmul.f32 %v294, %v315
    %v320 = vmul.f32 %v298, %v315
    %v321 = vmul.f32 %v302, %v315
    %v322 = vmul.f32 %v306, %v315
    %v323 = vmul.f32 %v310, %v315
    %v324 = vadd.f32 %v272, %v316
    %v325 = vadd.f32 %v273, %v317
    %v326 = vadd.f32 %v274, %v318
    %v327 = vadd.f32 %v275, %v319
    %v328 = vadd.f32 %v276, %v320
    %v329 = vadd.f32 %v277, %v321
    %v330 = vadd.f32 %v278, %v322
    %v331 = vadd.f32 %v279, %v323
    %v332 = vmax.f32 %v324, 0.0
    %v333 = vmax.f32 %v325, 0.0
    %v334 = vmax.f32 %v326, 0.0
    %v335 = vmax.f32 %v327, 0.0
    %v336 = vmax.f32 %v328, 0.0
    %v337 = vmax.f32 %v329, 0.0
    %v338 = vmax.f32 %v330, 0.0
    %v339 = vmax.f32 %v331, 0.0
    %340 = vset.pattern.permute.xlu0 6
    %341 = vperm.xlu0 %340, %v19
    %v342 = vpop.permute.xlu0 %341
    %344 = vset.pattern.permute.xlu0 6
    %345 = vperm.xlu0 %344, %v20
    %v346 = vpop.permute.xlu0 %345
    %348 = vset.pattern.permute.xlu0 6
    %349 = vperm.xlu0 %348, %v21
    %v350 = vpop.permute.xlu0 %349
    %352 = vset.pattern.permute.xlu0 6
    %353 = vperm.xlu0 %352, %v22
    %v354 = vpop.permute.xlu0 %353
    %356 = vset.pattern.permute.xlu0 6
    %357 = vperm.xlu0 %356, %v23
    %v358 = vpop.permute.xlu0 %357
    %360 = vset.pattern.permute.xlu0 6
    %361 = vperm.xlu0 %360, %v24
    %v362 = vpop.permute.xlu0 %361
    %364 = vset.pattern.permute.xlu0 6
    %365 = vperm.xlu0 %364, %v25
    %v366 = vpop.permute.xlu0 %365
    %368 = vset.pattern.permute.xlu0 6
    %369 = vperm.xlu0 %368, %v26
    %v370 = vpop.permute.xlu0 %369
    %v372 = vmul.f32 %v332, %v342
    %v373 = vmul.f32 %v333, %v346
    %v374 = vmul.f32 %v334, %v350
    %v375 = vmul.f32 %v335, %v354
    %v376 = vmul.f32 %v336, %v358
    %v377 = vmul.f32 %v337, %v362
    %v378 = vmul.f32 %v338, %v366
    %v379 = vmul.f32 %v339, %v370
    %vm380 = vcmask 64512
    %v381 = vsel %vm380, %v372, 0.0
    %v382 = vsel %vm380, %v373, 0.0
    %v383 = vadd.f32 %v381, %v382
    %v384 = vsel %vm380, %v374, 0.0
    %v385 = vadd.f32 %v383, %v384
    %v386 = vsel %vm380, %v375, 0.0
    %v387 = vadd.f32 %v385, %v386
    %v388 = vsel %vm380, %v376, 0.0
    %v389 = vadd.f32 %v387, %v388
    %v390 = vsel %vm380, %v377, 0.0
    %v391 = vadd.f32 %v389, %v390
    %v392 = vsel %vm380, %v378, 0.0
    %v393 = vadd.f32 %v391, %v392
    %v394 = vsel %vm380, %v379, 0.0
    %v395 = vadd.f32 %v393, %v394
    %v396 = vrot.slane %v395, 4
    %v397 = vadd.f32 %v395, %v396
    %v398 = vrot.slane %v397, 2
    %v399 = vadd.f32 %v397, %v398
    %v400 = vrot.slane %v399, 1
    %v401 = vadd.f32 %v399, %v400
    %v402 = vstv %s27
    %v403 = vadd.f32 %v401, %v402
    %vm404 = vcmask 57344
    %405 = vst.msk [vmem:[#allocation3] sm:$0x1] %vm404, %v403
    // Predicated region
    $region18: #{tpu_custom_call.1} parent=1 // pred_check
      _
    $region19: #{tpu_custom_call.1} parent=1 // pred_check_branch
      %407 = sbr.rel (0) target = $region21
    $region20: #{tpu_custom_call.1} parent=1 // pred_region
      %s409 = ssub.s32 16, 16
      %410 = vsyncadd [#allocation4], %s409
      %s412 = sshll.u32 [#allocation3], 4
      %s413 = int_to_ptr.vmem [resolvable:$true] %s412
      %415 = dma.vmem_to_hbm [thread:$0]  %s413, 16, %s4, [#allocation4]
    $region21: #{tpu_custom_call.1} parent=1 // pred_fallthru
      _
    // Predicated region
    $region22: #{tpu_custom_call.1} parent=1 // pred_check
      _
    $region23: #{tpu_custom_call.1} parent=1 // pred_check_branch
      %417 = sbr.rel (0) target = $region25
    $region24: #{tpu_custom_call.1} parent=1 // pred_region
      %418 = dma.done [#allocation4], 16
    $region25: #{tpu_custom_call.1} parent=1 // pred_fallthru
      _
    %419 = vsyncpa [#allocation4], 1

</llo_original>
